<compile_context>
chip_gen: v7x
topology: tpu7x:2x2x1
jax: 0.10.0
libtpu: 0.0.40
codegen_flags: <defaults>
</compile_context>

<pallas_src>
import functools

import jax
import jax.numpy as jnp
from jax.experimental import pallas as pl
from jax.experimental.pallas import tpu as pltpu


def _round_up(x, m):
    return ((x + m - 1) // m) * m


def _vmem_limit_bytes():
    # Generation-aware scoped-VMEM budget (~3/4 of physical, capped); 48 MiB
    # fallback keeps v7x (64 MiB physical) safe.
    try:
        cap = getattr(pltpu.get_tpu_info(), "vmem_capacity_bytes", None)
        if cap:
            return int(min(cap * 3 // 4, 100 * 1024 * 1024))
    except Exception:
        pass
    return 48 * 1024 * 1024


_VMEM_LIMIT = _vmem_limit_bytes()


def _cparams(sem):
    return pltpu.CompilerParams(dimension_semantics=sem,
                                vmem_limit_bytes=_VMEM_LIMIT)


def _pick_m_tile(M, tmax=512):
    """(tile, padded_M): largest tile <= tmax dividing M (mult of 8 unless == M)."""
    if M <= tmax:
        return M, M
    t = tmax - (tmax % 8)
    while t >= 8:
        if M % t == 0:
            return t, M
        t -= 8
    return tmax, _round_up(M, tmax)


def _pick_div_tile(n, tmax):
    """Largest multiple-of-8 divisor of n that is <= tmax, else n (one block)."""
    if n <= tmax:
        return n
    t = tmax - (tmax % 8)
    while t >= 8:
        if n % t == 0:
            return t
        t -= 8
    return n


# ----------------------------------------------------------------------------
# Pointwise (1x1) conv + folded BN + optional ReLU.  bf16 in / bf16 out, f32
# accumulation on the MXU.
# ----------------------------------------------------------------------------
def _pw_kernel(x_ref, w_ref, b_ref, o_ref, *, relu):
    acc = jnp.dot(x_ref[...], w_ref[...], preferred_element_type=jnp.float32)
    y = acc + b_ref[...]
    if relu:
        y = jnp.maximum(y, 0.0)
    o_ref[...] = y.astype(o_ref.dtype)


def _pw2d(x2d_bf16, w_bf16, bias_f32, relu):
    M, Cin = x2d_bf16.shape
    Cout = w_bf16.shape[1]
    TM, Mp = _pick_m_tile(M)
    xp = x2d_bf16 if Mp == M else jnp.pad(x2d_bf16, ((0, Mp - M), (0, 0)))
    out = pl.pallas_call(
        functools.partial(_pw_kernel, relu=relu),
        out_shape=jax.ShapeDtypeStruct((Mp, Cout), jnp.bfloat16),
        grid_spec=pltpu.PrefetchScalarGridSpec(
            num_scalar_prefetch=0,
            grid=(Mp // TM,),
            in_specs=[
                pl.BlockSpec((TM, Cin), lambda i: (i, 0)),
                pl.BlockSpec((Cin, Cout), lambda i: (0, 0)),
                pl.BlockSpec((1, Cout), lambda i: (0, 0)),
            ],
            out_specs=pl.BlockSpec((TM, Cout), lambda i: (i, 0)),
        ),
        compiler_params=_cparams(("parallel",)),
    )(xp, w_bf16, bias_f32.reshape(1, -1))
    return out if Mp == M else out[:M]


def pallas_pw(t, w, scale, bias, relu, out_pad=0):
    """1x1 conv + folded BN + optional ReLU on NHWC (bf16 activations).
    out_pad: zero-pad Cout by this many extra lanes (lane-dense stores /
    downstream channel alignment); padded channels are returned."""
    n, h, wd, ci = t.shape
    cout = w.shape[1]
    w_eff = w * scale[None, :]
    b = bias
    if out_pad:
        w_eff = jnp.pad(w_eff, ((0, 0), (0, out_pad)))
        b = jnp.pad(bias, (0, out_pad))
        cout += out_pad
    M = n * h * wd
    x2d = t.reshape(M, ci)
    if M < 8:
        # tiny map (ASPP global-pooling branch): plain JAX, no kernel launch
        y = jnp.dot(x2d.astype(jnp.float32), w_eff,
                    precision=jax.lax.Precision.HIGHEST) + b
        if relu:
            y = jnp.maximum(y, 0.0)
        return y.astype(t.dtype).reshape(n, h, wd, cout)
    y = _pw2d(x2d.astype(jnp.bfloat16), w_eff.astype(jnp.bfloat16),
              b.astype(jnp.float32), relu)
    return y.reshape(n, h, wd, cout)


# ----------------------------------------------------------------------------
# Fused SeparableConv2d(relu_first=False):
#   depthwise 3x3 (dilated) -> BN -> ReLU -> pointwise 1x1 -> BN -> ReLU
# Grid (N, Cin/TC); the depthwise tile is produced as a value and fed straight
# into one (H*W, TC)@(TC, Cout) MXU matmul accumulated over Cin tiles.
# ----------------------------------------------------------------------------
def _sepconv_kernel(xp_ref, dww_ref, dwb_ref, pww_ref, pwb_ref,
                    o_ref, acc_ref, *, d, base):
    c = pl.program_id(1)
    H, W, Cout = o_ref.shape[1:]
    TC = xp_ref.shape[3]

    # depthwise taps (BN scale folded into dww), f32 accumulation, ReLU
    # TODO(synk): the (d_max - d) + k*d shifts could use pltpu.roll (XLU slot)
    # instead of unaligned sublane slices.
    dw = jnp.zeros((H, W, TC), jnp.float32)
    for ky in range(3):
        for kx in range(3):
            r0 = base + ky * d
            c0 = base + kx * d
            tap = xp_ref[0, r0:r0 + H, c0:c0 + W, :] * dww_ref[ky * 3 + kx, :]
            dw = dw + tap.astype(jnp.float32)
    dw = jnp.maximum(dw + dwb_ref[0, :], 0.0).astype(jnp.bfloat16)

    @pl.when(c == 0)
    def _():
        acc_ref[...] = jnp.zeros_like(acc_ref)

    acc_ref[...] += jnp.dot(dw.reshape(H * W, TC), pww_ref[...],
                            preferred_element_type=jnp.float32)

    @pl.when(c == pl.num_programs(1) - 1)
    def _():
        y = jnp.maximum(acc_ref[...] + pwb_ref[...], 0.0)
        o_ref[0] = y.reshape(H, W, Cout).astype(o_ref.dtype)


def pallas_sepconv(t, p, d, prepadded=0):
    """t: NHWC (bf16).  If prepadded>0, t already carries `prepadded` rows/cols
    of zero spatial padding per edge (prepadded >= d) shared across branches."""
    if prepadded:
        pad = prepadded
        xp = t
    else:
        pad = d
        xp = jnp.pad(t, ((0, 0), (d, d), (d, d), (0, 0)))
    xp = xp.astype(jnp.bfloat16)
    N, Hp, Wp, Cin = xp.shape
    H, W = Hp - 2 * pad, Wp - 2 * pad
    base = pad - d
    Cout = p['pw_w'].shape[1]

    dw_w = (p['dw_w'] * p['dw_scale'][None, :]).astype(jnp.bfloat16)
    dw_b = p['dw_bias'].astype(jnp.float32)
    pw_w = (p['pw_w'] * p['pw_scale'][None, :]).astype(jnp.bfloat16)
    pw_b = p['pw_bias'].astype(jnp.float32)

    # channel tiling: keep TC=128 by zero-padding Cin when it is >128 and ragged
    if Cin % 128 == 0:
        TC, Cin_p = 128, Cin
    elif Cin > 128:
        Cin_p = _round_up(Cin, 128)
        TC = 128
        xp = jnp.pad(xp, ((0, 0), (0, 0), (0, 0), (0, Cin_p - Cin)))
        dw_w = jnp.pad(dw_w, ((0, 0), (0, Cin_p - Cin)))
        dw_b = jnp.pad(dw_b, (0, Cin_p - Cin))
        pw_w = jnp.pad(pw_w, ((0, Cin_p - Cin), (0, 0)))
    else:
        TC, Cin_p = Cin, Cin

    # TODO(synk): add spatial (H) halo tiling so the per-step working set stays
    # <~10 MiB at real 128x128 decoder sizes on v7x's 64 MiB VMEM.
    return pl.pallas_call(
        functools.partial(_sepconv_kernel, d=d, base=base),
        out_shape=jax.ShapeDtypeStruct((N, H, W, Cout), jnp.bfloat16),
        grid_spec=pltpu.PrefetchScalarGridSpec(
            num_scalar_prefetch=0,
            grid=(N, Cin_p // TC),
            in_specs=[
                pl.BlockSpec((1, Hp, Wp, TC), lambda n, c: (n, 0, 0, c)),
                pl.BlockSpec((9, TC), lambda n, c: (0, c)),
                pl.BlockSpec((1, TC), lambda n, c: (0, c)),
                pl.BlockSpec((TC, Cout), lambda n, c: (c, 0)),
                pl.BlockSpec((1, Cout), lambda n, c: (0, 0)),
            ],
            out_specs=pl.BlockSpec((1, H, W, Cout), lambda n, c: (n, 0, 0, 0)),
            scratch_shapes=[pltpu.VMEM((H * W, Cout), jnp.float32)],
        ),
        compiler_params=_cparams(("parallel", "arbitrary")),
    )(xp, dw_w, dw_b.reshape(1, -1), pw_w, pw_b.reshape(1, -1))


# ----------------------------------------------------------------------------
# ASPP projection without the 1280-channel concat: per-branch weight slabs are
# accumulated inside one kernel; the image-pooling branch is a per-batch offset.
# ----------------------------------------------------------------------------
def _aspp_proj_kernel(pool_ref, x0_ref, x1_ref, x2_ref, x3_ref,
                      w0_ref, w1_ref, w2_ref, w3_ref, b_ref, o_ref):
    acc = jnp.dot(x0_ref[0], w0_ref[...], preferred_element_type=jnp.float32)
    acc = acc + jnp.dot(x1_ref[0], w1_ref[...], preferred_element_type=jnp.float32)
    acc = acc + jnp.dot(x2_ref[0], w2_ref[...], preferred_element_type=jnp.float32)
    acc = acc + jnp.dot(x3_ref[0], w3_ref[...], preferred_element_type=jnp.float32)
    o_ref[0] = jnp.maximum(acc + pool_ref[0] + b_ref[...], 0.0).astype(o_ref.dtype)


def pallas_aspp_proj(pool_contrib, branches, w_slabs, bias):
    N, H, W, Cb = branches[0].shape
    Cout = w_slabs[0].shape[1]
    HW = H * W
    TM, HWp = _pick_m_tile(HW)
    xs = [b.reshape(N, HW, Cb).astype(jnp.bfloat16) for b in branches]
    if HWp != HW:
        xs = [jnp.pad(xx, ((0, 0), (0, HWp - HW), (0, 0))) for xx in xs]
    pool2 = pool_contrib.reshape(N, 1, Cout).astype(jnp.float32)
    in_specs = ([pl.BlockSpec((1, 1, Cout), lambda n, m: (n, 0, 0))]
                + [pl.BlockSpec((1, TM, Cb), lambda n, m: (n, m, 0))] * 4
                + [pl.BlockSpec((Cb, Cout), lambda n, m: (0, 0))] * 4
                + [pl.BlockSpec((1, Cout), lambda n, m: (0, 0))])
    out = pl.pallas_call(
        _aspp_proj_kernel,
        out_shape=jax.ShapeDtypeStruct((N, HWp, Cout), jnp.bfloat16),
        grid_spec=pltpu.PrefetchScalarGridSpec(
            num_scalar_prefetch=0,
            grid=(N, HWp // TM),
            in_specs=in_specs,
            out_specs=pl.BlockSpec((1, TM, Cout), lambda n, m: (n, m, 0)),
        ),
        compiler_params=_cparams(("parallel", "parallel")),
    )(pool2, *xs, *w_slabs, bias.reshape(1, -1).astype(jnp.float32))
    if HWp != HW:
        out = out[:, :HW]
    return out.reshape(N, H, W, Cout)


def pallas_aspp_proj_op(pool_feat, branches, proj_params, size):
    del size
    w, scale, bias = proj_params
    Cb = branches[0].shape[-1]
    w_eff = w * scale[None, :]
    slabs = [w_eff[Cb * (k + 1):Cb * (k + 2)].astype(jnp.bfloat16)
             for k in range(4)]
    # pooled-branch projection == per-batch additive term (tiny; plain JAX)
    pool2 = pool_feat.reshape(pool_feat.shape[0], Cb).astype(jnp.float32)
    pool_contrib = jnp.dot(pool2, w_eff[:Cb],
                           precision=jax.lax.Precision.HIGHEST)
    return pallas_aspp_proj(pool_contrib, branches, slabs, bias)


# ----------------------------------------------------------------------------
# Separable bilinear resize (align_corners=True): H pass then W pass, bf16.
# ----------------------------------------------------------------------------
def _interp_matrix(in_size, out_size):
    """Row-stochastic 1-D bilinear interpolation matrix, align_corners=True."""
    if in_size == 1:
        return jnp.ones((out_size, 1), jnp.float32)
    scale = (in_size - 1) / max(out_size - 1, 1)
    pos = jnp.arange(out_size, dtype=jnp.float32) * scale
    i0 = jnp.clip(jnp.floor(pos), 0, in_size - 1).astype(jnp.int32)
    i1 = jnp.clip(i0 + 1, 0, in_size - 1)
    frac = pos - i0.astype(jnp.float32)
    rows = jnp.arange(out_size)
    R = jnp.zeros((out_size, in_size), jnp.float32)
    R = R.at[rows, i0].add(1.0 - frac)
    R = R.at[rows, i1].add(frac)
    return R


def _resize_h_kernel(rh_ref, x_ref, o_ref):
    o_ref[0] = jnp.dot(rh_ref[...], x_ref[0],
                       preferred_element_type=jnp.float32).astype(o_ref.dtype)


def _resize_w_kernel(rw_ref, x_ref, o_ref):
    rw = rw_ref[...]
    for i in range(x_ref.shape[0]):
        o_ref[i] = jnp.dot(rw, x_ref[i],
                           preferred_element_type=jnp.float32).astype(o_ref.dtype)


def pallas_resize(t, Hout, Wout):
    N, Hin, Win, C = t.shape
    t = t.astype(jnp.bfloat16)
    Rh = _interp_matrix(Hin, Hout).astype(jnp.bfloat16)
    Rw = _interp_matrix(Win, Wout).astype(jnp.bfloat16)

    # pass 1: interpolate along H; (Win*C) stays the lane-dense trailing dim
    WC = Win * C
    TH = _pick_div_tile(Hout, 64)
    t1 = pl.pallas_call(
        _resize_h_kernel,
        out_shape=jax.ShapeDtypeStruct((N, Hout, WC), jnp.bfloat16),
        grid_spec=pltpu.PrefetchScalarGridSpec(
            num_scalar_prefetch=0,
            grid=(N, Hout // TH),
            in_specs=[
                pl.BlockSpec((TH, Hin), lambda n, h: (h, 0)),
                pl.BlockSpec((1, Hin, WC), lambda n, h: (n, 0, 0)),
            ],
            out_specs=pl.BlockSpec((1, TH, WC), lambda n, h: (n, h, 0)),
        ),
        compiler_params=_cparams(("parallel", "parallel")),
    )(Rh, t.reshape(N, Hin, WC))

    # pass 2: interpolate along W; batched over (N*Hout) rows, C in lanes
    rows = N * Hout
    TB = _pick_div_tile(rows, 32)
    out = pl.pallas_call(
        _resize_w_kernel,
        out_shape=jax.ShapeDtypeStruct((rows, Wout, C), jnp.bfloat16),
        grid_spec=pltpu.PrefetchScalarGridSpec(
            num_scalar_prefetch=0,
            grid=(rows // TB,),
            in_specs=[
                pl.BlockSpec((Wout, Win), lambda r: (0, 0)),
                pl.BlockSpec((TB, Win, C), lambda r: (r, 0, 0)),
            ],
            out_specs=pl.BlockSpec((TB, Wout, C), lambda r: (r, 0, 0)),
        ),
        compiler_params=_cparams(("parallel",)),
    )(Rw, t1.reshape(rows, Win, C))
    return out.reshape(N, Hout, Wout, C)


# ----------------------------------------------------------------------------
# Pure-JAX reference ops (same math, f32 HIGHEST precision, for verification)
# ----------------------------------------------------------------------------
def ref_pw(t, w, scale, bias, relu, out_pad=0):
    if out_pad:
        w = jnp.pad(w, ((0, 0), (0, out_pad)))
        scale = jnp.pad(scale, (0, out_pad), constant_values=1.0)
        bias = jnp.pad(bias, (0, out_pad))
    y = jnp.einsum('nhwc,cd->nhwd', t, w,
                   precision=jax.lax.Precision.HIGHEST) * scale + bias
    return jnp.maximum(y, 0.0) if relu else y


def ref_sepconv(t, p, d, prepadded=0):
    if prepadded:
        t = t[:, prepadded:-prepadded, prepadded:-prepadded, :]
    C = t.shape[-1]
    w = p['dw_w'].reshape(3, 3, 1, C)
    y = jax.lax.conv_general_dilated(
        t, w, (1, 1), [(d, d), (d, d)], rhs_dilation=(d, d),
        dimension_numbers=('NHWC', 'HWIO', 'NHWC'),
        feature_group_count=C, precision=jax.lax.Precision.HIGHEST)
    y = jnp.maximum(y * p['dw_scale'] + p['dw_bias'], 0.0)
    return ref_pw(y, p['pw_w'], p['pw_scale'], p['pw_bias'], True)


def ref_resize(t, Hout, Wout):
    N, Hin, Win, C = t.shape
    Rh = _interp_matrix(Hin, Hout)
    Rw = _interp_matrix(Win, Wout)
    return jnp.einsum('ah,bw,nhwc->nabc', Rh, Rw, t,
                      precision=jax.lax.Precision.HIGHEST)


def ref_aspp_proj_op(pool_feat, branches, proj_params, size):
    w, scale, bias = proj_params
    N = branches[0].shape[0]
    Hx, Wx = size
    pool_b = jnp.broadcast_to(pool_feat, (N, Hx, Wx, pool_feat.shape[-1]))
    cat = jnp.concatenate([pool_b] + list(branches), axis=-1)
    return ref_pw(cat, w, scale, bias, True)


# ----------------------------------------------------------------------------
# _DeepLabHead forward (use_aspp=True, use_decoder=True), parameterized by ops
# ----------------------------------------------------------------------------
def _pad_sep_cin(p, extra):
    return dict(
        dw_w=jnp.pad(p['dw_w'], ((0, 0), (0, extra))),
        dw_scale=jnp.pad(p['dw_scale'], (0, extra)),
        dw_bias=jnp.pad(p['dw_bias'], (0, extra)),
        pw_w=jnp.pad(p['pw_w'], ((0, extra), (0, 0))),
        pw_scale=p['pw_scale'], pw_bias=p['pw_bias'])


def head_forward(ops, params, x_nchw, c1_nchw, act_dtype):
    x = jnp.transpose(x_nchw, (0, 2, 3, 1)).astype(act_dtype)   # NCHW -> NHWC
    c1 = jnp.transpose(c1_nchw, (0, 2, 3, 1)).astype(act_dtype)
    N, Hx, Wx, _ = x.shape
    _, H1, W1, _ = c1.shape

    # ---------------- _ASPP ----------------
    gap = jnp.mean(x.astype(jnp.float32), axis=(1, 2),
                   keepdims=True).astype(act_dtype)
    pool = ops['pw'](gap, *params['aspp_pool'], True)     # image-pooling branch
    x0 = ops['pw'](x, *params['aspp0'], True)             # aspp0: 1x1 conv+BN+ReLU
    d_max = 18                                             # OS16 dilations (6,12,18)
    xp = jnp.pad(x, ((0, 0), (d_max, d_max), (d_max, d_max), (0, 0)))
    x1 = ops['sep'](xp, params['aspp1'], 6, prepadded=d_max)
    x2 = ops['sep'](xp, params['aspp2'], 12, prepadded=d_max)
    x3 = ops['sep'](xp, params['aspp3'], 18, prepadded=d_max)
    a = ops['proj'](pool, [x0, x1, x2, x3], params['aspp_proj'], (Hx, Wx))
    # nn.Dropout(0.5): identity in eval  # TODO(synk): training-mode dropout not modeled

    # ---------------- decoder ----------------
    up = ops['resize'](a, H1, W1)                          # F.interpolate(align_corners=True)
    aspp_out = a.shape[-1]
    c1_red = params['c1_block'][0].shape[1]
    # lane-align the decoder concat when possible (real sizes: 256+48 -> 384)
    if aspp_out % 128 == 0 and (aspp_out + c1_red) % 128 != 0:
        c1_pad = _round_up(aspp_out + c1_red, 128) - aspp_out - c1_red
    else:
        c1_pad = 0
    c1r = ops['pw'](c1, *params['c1_block'], True, c1_pad)  # _ConvBNReLU(c1_ch, 48, 1)
    y = jnp.concatenate([up, c1r], axis=-1)                 # small concat kept in XLA

    # ---------------- self.block ----------------
    sep1 = params['sep1'] if c1_pad == 0 else _pad_sep_cin(params['sep1'], c1_pad)
    y = ops['sep'](y, sep1, 1)
    y = ops['sep'](y, params['sep2'], 1)
    nclass = params['final_w'].shape[1]
    out_pad = _round_up(nclass, 128) - nclass               # lane-dense classifier stores
    out = ops['pw'](y, params['final_w'], jnp.ones((nclass,), jnp.float32),
                    params['final_b'], False, out_pad)
    out = out[..., :nclass]
    return jnp.transpose(out, (0, 3, 1, 2))                  # NHWC -> NCHW


# ----------------------------------------------------------------------------
# Deterministic parameter construction (BN folded to scale/bias, eps=1e-5)
# ----------------------------------------------------------------------------
def init_params(key, c4, c1c, aspp_out, c1_red, mid, nclass):
    keys = iter(jax.random.split(key, 128))

    def conv1x1(cin, cout):
        return jax.random.normal(next(keys), (cin, cout), jnp.float32) / jnp.sqrt(cin)

    def dwconv(c):
        return jax.random.normal(next(keys), (9, c), jnp.float32) / 3.0

    def bn(c):
        g = 1.0 + 0.1 * jax.random.normal(next(keys), (c,), jnp.float32)
        b = 0.1 * jax.random.normal(next(keys), (c,), jnp.float32)
        m = 0.1 * jax.random.normal(next(keys), (c,), jnp.float32)
        v = 0.5 + 0.1 * jnp.abs(jax.random.normal(next(keys), (c,), jnp.float32))
        s = g / jnp.sqrt(v + 1e-5)
        return s, b - m * s

    def sep_p(cin, cout):
        s1, b1 = bn(cin)
        s2, b2 = bn(cout)
        return dict(dw_w=dwconv(cin), dw_scale=s1, dw_bias=b1,
                    pw_w=conv1x1(cin, cout), pw_scale=s2, pw_bias=b2)

    p = {}
    p['aspp_pool'] = (conv1x1(c4, aspp_out), *bn(aspp_out))
    p['aspp0'] = (conv1x1(c4, aspp_out), *bn(aspp_out))
    p['aspp1'] = sep_p(c4, aspp_out)
    p['aspp2'] = sep_p(c4, aspp_out)
    p['aspp3'] = sep_p(c4, aspp_out)
    p['aspp_proj'] = (conv1x1(5 * aspp_out, aspp_out), *bn(aspp_out))
    p['c1_block'] = (conv1x1(c1c, c1_red), *bn(c1_red))
    p['sep1'] = sep_p(aspp_out + c1_red, mid)
    p['sep2'] = sep_p(mid, mid)
    p['final_w'] = conv1x1(mid, nclass)
    p['final_b'] = 0.1 * jax.random.normal(next(keys), (nclass,), jnp.float32)
    return p


# ----------------------------------------------------------------------------
if __name__ == "__main__":
    key = jax.random.PRNGKey(0)
    kx, kc, kp = jax.random.split(key, 3)

    # Small synthetic shapes (stand-ins for c4_channels=2048, c1_channels=256,
    # aspp/mid=256, c1-reduce=48 of the real module).  Spatial dims kept as
    # multiples of 8 so sublane-merging reshapes in the sepconv kernel are cheap.
    N = 2
    C4, HX, WX = 32, 8, 8        # high-level feature x (output_stride-16 scale)
    C1, H1, W1 = 24, 32, 32      # low-level feature c1
    ASPP_OUT, C1_RED, MID, NCLASS = 32, 16, 32, 6

    x = jax.random.normal(kx, (N, C4, HX, WX), jnp.float32)     # NCHW like PyTorch
    c1 = jax.random.normal(kc, (N, C1, H1, W1), jnp.float32)
    params = init_params(kp, C4, C1, ASPP_OUT, C1_RED, MID, NCLASS)

    pallas_ops = dict(pw=pallas_pw, sep=pallas_sepconv,
                      resize=pallas_resize, proj=pallas_aspp_proj_op)
    ref_ops = dict(pw=ref_pw, sep=ref_sepconv,
                   resize=ref_resize, proj=ref_aspp_proj_op)

    out = head_forward(pallas_ops, params, x, c1, jnp.bfloat16)
    out = jax.block_until_ready(out)

    ref = head_forward(ref_ops, params, x, c1, jnp.float32)
    ref = jax.block_until_ready(ref)

    assert out.shape == (N, NCLASS, H1, W1), out.shape
    # tolerance accounts for end-to-end bf16 activation chaining (f32 MXU acc)
    # versus the f32 HIGHEST-precision reference
    rel_err = float(jnp.max(jnp.abs(out.astype(jnp.float32) - ref))
                    / (jnp.max(jnp.abs(ref)) + 1e-6))
    assert rel_err < 5e-2, f"relative error too large: {rel_err}"

    print("KERNEL_OK")
</pallas_src>

<mosaic_0001>
module attributes {stable_mosaic.version = 11 : i64} {
  func.func @_pw_kernel(%arg0: i32, %arg1: memref<128x32xbf16, #tpu.memory_space<vmem>>, %arg2: memref<32x32xbf16, #tpu.memory_space<vmem>>, %arg3: memref<1x32xf32, #tpu.memory_space<vmem>>, %arg4: memref<128x32xbf16, #tpu.memory_space<vmem>>) attributes {dimension_semantics = [#tpu.dimension_semantics<parallel>], iteration_bounds = array<i64: 1>, scalar_prefetch = 0 : i64, scratch_operands = 0 : i64, tpu.core_type = #tpu.core_type<tc>, window_params = [{transform_indices = @transform_0, window_bounds = array<i64: 128, 32>}, {pipeline_mode = #tpu.pipeline_mode<synchronous>, transform_indices = @transform_1, window_bounds = array<i64: 32, 32>}, {pipeline_mode = #tpu.pipeline_mode<synchronous>, transform_indices = @transform_2, window_bounds = array<i64: 1, 32>}, {transform_indices = @transform_3, window_bounds = array<i64: 128, 32>}]} {
    %c0 = arith.constant 0 : index
    %c0_0 = arith.constant 0 : index
    %0 = vector.load %arg1[%c0, %c0_0] : memref<128x32xbf16, #tpu.memory_space<vmem>>, vector<128x32xbf16>
    %c0_1 = arith.constant 0 : index
    %c0_2 = arith.constant 0 : index
    %1 = vector.load %arg2[%c0_1, %c0_2] : memref<32x32xbf16, #tpu.memory_space<vmem>>, vector<32x32xbf16>
    %cst = arith.constant dense<0.000000e+00> : vector<128x32xf32>
    %2 = tpu.matmul %0, %1, %cst {dimension_numbers = #tpu.dot_dimension_numbers<[1], [0], [0], [1], [0, 0, 1, 1], [], []>} : vector<128x32xbf16>, vector<32x32xbf16>, vector<128x32xf32> -> vector<128x32xf32>
    %c0_3 = arith.constant 0 : index
    %c0_4 = arith.constant 0 : index
    %3 = vector.load %arg3[%c0_3, %c0_4] : memref<1x32xf32, #tpu.memory_space<vmem>>, vector<1x32xf32>
    %4 = vector.broadcast %3 : vector<1x32xf32> to vector<128x32xf32>
    %5 = arith.addf %2, %4 : vector<128x32xf32>
    %cst_5 = arith.constant 0.000000e+00 : f32
    %6 = vector.broadcast %cst_5 : f32 to vector<128x32xf32>
    %7 = arith.maximumf %5, %6 : vector<128x32xf32>
    %8 = arith.truncf %7 : vector<128x32xf32> to vector<128x32xbf16>
    %c0_6 = arith.constant 0 : index
    %c0_7 = arith.constant 0 : index
    %9 = vector.load %arg4[%c0_6, %c0_7] : memref<128x32xbf16, #tpu.memory_space<vmem>>, vector<128x32xbf16>
    tpu.vector_store %arg4[%c0_6, %c0_7], %8 {strides = array<i32>} : memref<128x32xbf16, #tpu.memory_space<vmem>>, vector<128x32xbf16>,
    return
  }
  func.func @transform_0(%arg0: i32) -> (i32, i32) {
    %c0_i32 = arith.constant 0 : i32
    %c0_i32_0 = arith.constant 0 : i32
    return %arg0, %c0_i32 : i32, i32
  }
  func.func @transform_1(%arg0: i32) -> (i32, i32) {
    %c0_i32 = arith.constant 0 : i32
    %c0_i32_0 = arith.constant 0 : i32
    %c0_i32_1 = arith.constant 0 : i32
    return %c0_i32, %c0_i32_0 : i32, i32
  }
  func.func @transform_2(%arg0: i32) -> (i32, i32) {
    %c0_i32 = arith.constant 0 : i32
    %c0_i32_0 = arith.constant 0 : i32
    %c0_i32_1 = arith.constant 0 : i32
    return %c0_i32, %c0_i32_0 : i32, i32
  }
  func.func @transform_3(%arg0: i32) -> (i32, i32) {
    %c0_i32 = arith.constant 0 : i32
    %c0_i32_0 = arith.constant 0 : i32
    return %arg0, %c0_i32 : i32, i32
  }
}

</mosaic_0001>

<llo_original>
// kernel: tpu_custom_call.1
$region0: #{tpu_custom_call.1}
  #allocation0 [shape = 'u32[]', space=smem, size = 0x4, offset = 0x4, fixed_abs, tag = 'smem constant byte address 0x4 - core index']
  #allocation1 [shape = 'u32[144,128]{1,0:T(1,128)}', space=vmem, size = 0x12000, scoped, tag = 'internal scratch']
  %s0 = inlined_call_operand.vmem [shape: bf16[128,32], index: 0, kind: input, shape index: {}]
  %s1 = inlined_call_operand.vmem [shape: bf16[32,32], index: 1, kind: input, shape index: {}]
  %s2 = inlined_call_operand.vmem [shape: f32[1,32], index: 2, kind: input, shape index: {}]
  %s3 = inlined_call_operand.vmem [shape: bf16[128,32], index: 3, kind: output, shape index: {}]
  %s4 = sld [smem:[#allocation0]]
  $region22: #{tpu_custom_call.1} parent=0
    _
  %s6 = ssub.s32 1, %s4
  %s7 = scalar_select 0, %s6, %s4
  // Predicated region
  $region2: #{tpu_custom_call.1} parent=0 // pred_check
    _
  $region3: #{tpu_custom_call.1} parent=0 // pred_check_branch
    %9 = sbr.rel (0) target = $region5
  $region4: #{tpu_custom_call.1} parent=0 // pred_region
    _
  $region5: #{tpu_custom_call.1} parent=0 // pred_fallthru
    _
  // Predicated region
  $region6: #{tpu_custom_call.1} parent=0 // pred_check
    _
  $region7: #{tpu_custom_call.1} parent=0 // pred_check_branch
    %11 = sbr.rel (0) target = $region9
  $region8: #{tpu_custom_call.1} parent=0 // pred_region
    _
  $region9: #{tpu_custom_call.1} parent=0 // pred_fallthru
    _
  // Predicated region
  $region10: #{tpu_custom_call.1} parent=0 // pred_check
    _
  $region11: #{tpu_custom_call.1} parent=0 // pred_check_branch
    %13 = sbr.rel (0) target = $region13
  $region12: #{tpu_custom_call.1} parent=0 // pred_region
    _
  $region13: #{tpu_custom_call.1} parent=0 // pred_fallthru
    _
  %v15 = vld [vmem:[%s0] sm:$0xf]
  %v16 = vld [vmem:[%s0 + $0x4] sm:$0xf]
  %v17 = vld [vmem:[%s0 + $0x8] sm:$0xf]
  %v18 = vld [vmem:[%s0 + $0xc] sm:$0xf]
  %v19 = vld [vmem:[%s0 + $0x10] sm:$0xf]
  %v20 = vld [vmem:[%s0 + $0x14] sm:$0xf]
  %v21 = vld [vmem:[%s0 + $0x18] sm:$0xf]
  %v22 = vld [vmem:[%s0 + $0x1c] sm:$0xf]
  %v23 = vld [vmem:[%s0 + $0x20] sm:$0xf]
  %v24 = vld [vmem:[%s0 + $0x24] sm:$0xf]
  %v25 = vld [vmem:[%s0 + $0x28] sm:$0xf]
  %v26 = vld [vmem:[%s0 + $0x2c] sm:$0xf]
  %v27 = vld [vmem:[%s0 + $0x30] sm:$0xf]
  %v28 = vld [vmem:[%s0 + $0x34] sm:$0xf]
  %v29 = vld [vmem:[%s0 + $0x38] sm:$0xf]
  %v30 = vld [vmem:[%s0 + $0x3c] sm:$0xf]
  %v31 = vld [vmem:[%s1] sm:$0xf]
  %v32 = vld [vmem:[%s1 + $0x4] sm:$0xf]
  %v33 = vld [vmem:[%s1 + $0x8] sm:$0xf]
  %v34 = vld [vmem:[%s1 + $0xc] sm:$0xf]
  %v35 = vld [vmem:[%s2] sm:$0x1]
  %v37 = vlaneseq
  %v38 = vshrl.u32 %v37, 7
  %v39 = vsub.s32 0, %v38
  %v40 = vrot.slane %v35, %v39
  %v58 = vunpack.c.l.b16 %v15
  %v59 = vunpack.c.l.b16 %v16
  %v60 = vunpack.c.l.b16 %v17
  %v61 = vunpack.c.l.b16 %v18
  %v62 = vunpack.c.l.b16 %v19
  %v63 = vunpack.c.l.b16 %v20
  %v64 = vunpack.c.l.b16 %v21
  %v65 = vunpack.c.l.b16 %v22
  %v66 = vunpack.c.l.b16 %v23
  %v67 = vunpack.c.l.b16 %v24
  %v68 = vunpack.c.l.b16 %v25
  %v69 = vunpack.c.l.b16 %v26
  %v70 = vunpack.c.l.b16 %v27
  %v71 = vunpack.c.l.b16 %v28
  %v72 = vunpack.c.l.b16 %v29
  %v73 = vunpack.c.l.b16 %v30
  %v74 = vpack.c.b16 %v59, %v58
  %v75 = vpack.c.b16 %v61, %v60
  %v76 = vpack.c.b16 %v63, %v62
  %v77 = vpack.c.b16 %v65, %v64
  %v78 = vpack.c.b16 %v67, %v66
  %v79 = vpack.c.b16 %v69, %v68
  %v80 = vpack.c.b16 %v71, %v70
  %v81 = vpack.c.b16 %v73, %v72
  %v86 = vunpack.c.l.b16 %v31
  %v87 = vunpack.c.l.b16 %v32
  %v88 = vunpack.c.l.b16 %v33
  %v89 = vunpack.c.l.b16 %v34
  %v90 = vpack.c.b16 %v87, %v86
  %v91 = vpack.c.b16 %v89, %v88
  %vm94 = vcmask 261120
  %v96 = vsel %vm94, %v74, 0
  %v99 = vsel %vm94, %v75, 0
  %v102 = vsel %vm94, %v76, 0
  %v105 = vsel %vm94, %v77, 0
  %v108 = vsel %vm94, %v78, 0
  %v111 = vsel %vm94, %v79, 0
  %v114 = vsel %vm94, %v80, 0
  %v117 = vsel %vm94, %v81, 0
  %119 = vmatprep.subr.bf16.mxu0 0
  %120 = vmatpush1.bf16.msra.mxu0 %v90
  %121 = vmatprep.subr.bf16.mxu0 0
  %122 = vmatpush1.bf16.msra.mxu0 %v91
  %123 = vmatprep.subr.bf16.mxu0 0
  %124 = vmatpush1.bf16.msra.mxu0 0
  %125 = vmatprep.subr.bf16.mxu0 0
  %126 = vmatpush1.bf16.msra.mxu0 0
  %127 = vmatprep.subr.bf16.mxu0 0
  %128 = vmatpush1.bf16.msra.mxu0 0
  %129 = vmatprep.subr.bf16.mxu0 0
  %130 = vmatpush1.bf16.msra.mxu0 0
  %131 = vmatprep.subr.bf16.mxu0 0
  %132 = vmatpush1.bf16.msra.mxu0 0
  %133 = vmatprep.subr.bf16.mxu0 0
  %134 = vmatpush1.bf16.msra.mxu0 0
  %135 = vmatprep.subr.bf16.mxu0 0
  %136 = vmatpush1.bf16.msra.mxu0 0
  %137 = vmatprep.subr.bf16.mxu0 0
  %138 = vmatpush1.bf16.msra.mxu0 0
  %139 = vmatprep.subr.bf16.mxu0 0
  %140 = vmatpush1.bf16.msra.mxu0 0
  %141 = vmatprep.subr.bf16.mxu0 0
  %142 = vmatpush1.bf16.msra.mxu0 0
  %143 = vmatprep.subr.bf16.mxu0 0
  %144 = vmatpush1.bf16.msra.mxu0 0
  %145 = vmatprep.subr.bf16.mxu0 0
  %146 = vmatpush1.bf16.msra.mxu0 0
  %147 = vmatprep.subr.bf16.mxu0 0
  %148 = vmatpush1.bf16.msra.mxu0 0
  %149 = vmatprep.subr.bf16.mxu0 0
  %150 = vmatpush1.bf16.msra.mxu0 0
  %151 = vmatprep.mubr.bf16.mxu0 0
  %152 = vmatmul.mubr.bf16.gmra.mrb[0].mxu0 %v96
  %v153 = vpop.f32.mrb[0].mxu0
  %v154 = vadd.f32 %v40, %v153
  %v155 = vpop.f32.mrb[0].mxu0
  %v156 = vpop.f32.mrb[0].mxu0
  %v157 = vadd.f32 %v40, %v156
  %v158 = vpop.f32.mrb[0].mxu0
  %159 = vmatprep.mubr.bf16.mxu0 0
  %160 = vmatmul.mubr.bf16.gmra.mrb[0].mxu0 %v99
  %v161 = vpop.f32.mrb[0].mxu0
  %v162 = vadd.f32 %v40, %v161
  %v163 = vpop.f32.mrb[0].mxu0
  %v164 = vpop.f32.mrb[0].mxu0
  %v165 = vadd.f32 %v40, %v164
  %v166 = vpop.f32.mrb[0].mxu0
  %167 = vmatprep.mubr.bf16.mxu0 0
  %168 = vmatmul.mubr.bf16.gmra.mrb[0].mxu0 %v102
  %v169 = vpop.f32.mrb[0].mxu0
  %v170 = vadd.f32 %v40, %v169
  %v171 = vpop.f32.mrb[0].mxu0
  %v172 = vpop.f32.mrb[0].mxu0
  %v173 = vadd.f32 %v40, %v172
  %v174 = vpop.f32.mrb[0].mxu0
  %175 = vmatprep.mubr.bf16.mxu0 0
  %176 = vmatmul.mubr.bf16.gmra.mrb[0].mxu0 %v105
  %v177 = vpop.f32.mrb[0].mxu0
  %v178 = vadd.f32 %v40, %v177
  %v179 = vpop.f32.mrb[0].mxu0
  %v180 = vpop.f32.mrb[0].mxu0
  %v181 = vadd.f32 %v40, %v180
  %v182 = vpop.f32.mrb[0].mxu0
  %183 = vmatprep.mubr.bf16.mxu0 0
  %184 = vmatmul.mubr.bf16.gmra.mrb[0].mxu0 %v108
  %v185 = vpop.f32.mrb[0].mxu0
  %v186 = vadd.f32 %v40, %v185
  %v187 = vpop.f32.mrb[0].mxu0
  %v188 = vpop.f32.mrb[0].mxu0
  %v189 = vadd.f32 %v40, %v188
  %v190 = vpop.f32.mrb[0].mxu0
  %191 = vmatprep.mubr.bf16.mxu0 0
  %192 = vmatmul.mubr.bf16.gmra.mrb[0].mxu0 %v111
  %v193 = vpop.f32.mrb[0].mxu0
  %v194 = vadd.f32 %v40, %v193
  %v195 = vpop.f32.mrb[0].mxu0
  %v196 = vpop.f32.mrb[0].mxu0
  %v197 = vadd.f32 %v40, %v196
  %v198 = vpop.f32.mrb[0].mxu0
  %199 = vmatprep.mubr.bf16.mxu0 0
  %200 = vmatmul.mubr.bf16.gmra.mrb[0].mxu0 %v114
  %v201 = vpop.f32.mrb[0].mxu0
  %v202 = vadd.f32 %v40, %v201
  %v203 = vpop.f32.mrb[0].mxu0
  %v204 = vpop.f32.mrb[0].mxu0
  %v205 = vadd.f32 %v40, %v204
  %v206 = vpop.f32.mrb[0].mxu0
  %207 = vmatprep.mubr.bf16.mxu0 0
  %208 = vmatmul.mubr.bf16.gmra.mrb[0].mxu0 %v117
  %v209 = vpop.f32.mrb[0].mxu0
  %v210 = vadd.f32 %v40, %v209
  %v211 = vpop.f32.mrb[0].mxu0
  %v212 = vpop.f32.mrb[0].mxu0
  %v213 = vadd.f32 %v40, %v212
  %v214 = vpop.f32.mrb[0].mxu0
  %215 = vdwg.mxu0
  %v216 = vmax.f32 %v154, 0.0
  %v217 = vmax.f32 %v157, 0.0
  %v218 = vmax.f32 %v162, 0.0
  %v219 = vmax.f32 %v165, 0.0
  %v220 = vmax.f32 %v170, 0.0
  %v221 = vmax.f32 %v173, 0.0
  %v222 = vmax.f32 %v178, 0.0
  %v223 = vmax.f32 %v181, 0.0
  %v224 = vmax.f32 %v186, 0.0
  %v225 = vmax.f32 %v189, 0.0
  %v226 = vmax.f32 %v194, 0.0
  %v227 = vmax.f32 %v197, 0.0
  %v228 = vmax.f32 %v202, 0.0
  %v229 = vmax.f32 %v205, 0.0
  %v230 = vmax.f32 %v210, 0.0
  %v231 = vmax.f32 %v213, 0.0
  %v232 = vpack.c.bf16 %v217, %v216
  %v233 = vpack.c.bf16 %v219, %v218
  %v234 = vpack.c.bf16 %v221, %v220
  %v235 = vpack.c.bf16 %v223, %v222
  %v236 = vpack.c.bf16 %v225, %v224
  %v237 = vpack.c.bf16 %v227, %v226
  %v238 = vpack.c.bf16 %v229, %v228
  %v239 = vpack.c.bf16 %v231, %v230
  %v248 = vunpack.c.l.b16 %v232
  %v249 = vunpack.c.h.b16 %v232
  %v250 = vunpack.c.l.b16 %v233
  %v251 = vunpack.c.h.b16 %v233
  %v252 = vunpack.c.l.b16 %v234
  %v253 = vunpack.c.h.b16 %v234
  %v254 = vunpack.c.l.b16 %v235
  %v255 = vunpack.c.h.b16 %v235
  %v256 = vunpack.c.l.b16 %v236
  %v257 = vunpack.c.h.b16 %v236
  %v258 = vunpack.c.l.b16 %v237
  %v259 = vunpack.c.h.b16 %v237
  %v260 = vunpack.c.l.b16 %v238
  %v261 = vunpack.c.h.b16 %v238
  %v262 = vunpack.c.l.b16 %v239
  %v263 = vunpack.c.h.b16 %v239
  %v264 = vpack.c.b16 %v248, %v248
  %v265 = vpack.c.b16 %v249, %v249
  %v266 = vpack.c.b16 %v250, %v250
  %v267 = vpack.c.b16 %v251, %v251
  %v268 = vpack.c.b16 %v252, %v252
  %v269 = vpack.c.b16 %v253, %v253
  %v270 = vpack.c.b16 %v254, %v254
  %v271 = vpack.c.b16 %v255, %v255
  %v272 = vpack.c.b16 %v256, %v256
  %v273 = vpack.c.b16 %v257, %v257
  %v274 = vpack.c.b16 %v258, %v258
  %v275 = vpack.c.b16 %v259, %v259
  %v276 = vpack.c.b16 %v260, %v260
  %v277 = vpack.c.b16 %v261, %v261
  %v278 = vpack.c.b16 %v262, %v262
  %v279 = vpack.c.b16 %v263, %v263
  %vm296 = vcmask 257024
  %297 = vst.msk [vmem:[%s3] sm:$0xf] %vm296, %v264
  %298 = vst.msk [vmem:[%s3 + $0x4] sm:$0xf] %vm296, %v265
  %299 = vst.msk [vmem:[%s3 + $0x8] sm:$0xf] %vm296, %v266
  %300 = vst.msk [vmem:[%s3 + $0xc] sm:$0xf] %vm296, %v267
  %301 = vst.msk [vmem:[%s3 + $0x10] sm:$0xf] %vm296, %v268
  %302 = vst.msk [vmem:[%s3 + $0x14] sm:$0xf] %vm296, %v269
  %303 = vst.msk [vmem:[%s3 + $0x18] sm:$0xf] %vm296, %v270
  %304 = vst.msk [vmem:[%s3 + $0x1c] sm:$0xf] %vm296, %v271
  %305 = vst.msk [vmem:[%s3 + $0x20] sm:$0xf] %vm296, %v272
  %306 = vst.msk [vmem:[%s3 + $0x24] sm:$0xf] %vm296, %v273
  %307 = vst.msk [vmem:[%s3 + $0x28] sm:$0xf] %vm296, %v274
  %308 = vst.msk [vmem:[%s3 + $0x2c] sm:$0xf] %vm296, %v275
  %309 = vst.msk [vmem:[%s3 + $0x30] sm:$0xf] %vm296, %v276
  %310 = vst.msk [vmem:[%s3 + $0x34] sm:$0xf] %vm296, %v277
  %311 = vst.msk [vmem:[%s3 + $0x38] sm:$0xf] %vm296, %v278
  %312 = vst.msk [vmem:[%s3 + $0x3c] sm:$0xf] %vm296, %v279
  // Predicated region
  $region14: #{tpu_custom_call.1} parent=0 // pred_check
    _
  $region15: #{tpu_custom_call.1} parent=0 // pred_check_branch
    %314 = sbr.rel (0) target = $region17
  $region16: #{tpu_custom_call.1} parent=0 // pred_region
    _
  $region17: #{tpu_custom_call.1} parent=0 // pred_fallthru
    _
  // Predicated region
  $region18: #{tpu_custom_call.1} parent=0 // pred_check
    _
  $region19: #{tpu_custom_call.1} parent=0 // pred_check_branch
    %316 = sbr.rel (0) target = $region21
  $region20: #{tpu_custom_call.1} parent=0 // pred_region
    _
  $region21: #{tpu_custom_call.1} parent=0 // pred_fallthru
    _

</llo_original>
